<compile_context>
chip_gen: v6e
topology: v6e:2x2x1
jax: 0.10.0
libtpu: 0.0.40
codegen_flags: <defaults>
</compile_context>

<pallas_src>
import math

import jax
import jax.numpy as jnp
from jax.experimental import pallas as pl
from jax.experimental.pallas import tpu as pltpu


# ---------------------------------------------------------------------------
# Hardware introspection -> generation-aware tile / VMEM defaults
# ---------------------------------------------------------------------------
def _tpu_generation():
    try:
        kind = jax.devices()[0].device_kind.lower()
    except Exception:
        return "unknown"
    if "v7" in kind:
        return "v7x"
    if "v6" in kind:
        return "v6e"
    if "v5" in kind and ("lite" in kind or "v5e" in kind):
        return "v5e"
    if "v5" in kind:
        return "v5p"
    return "unknown"


def _vmem_physical_bytes():
    try:
        info = pltpu.get_tpu_info()
        cap = getattr(info, "vmem_capacity_bytes", None)
        if cap:
            return int(cap)
    except Exception:
        pass
    return None


def _tuning():
    """Returns (generation, tm_target, th_target, vmem_cap_bytes, gelu_dtype)."""
    gen = _tpu_generation()
    if gen == "v7x":
        # AI break-even ~310 FLOPs/byte; 64 MiB VMEM/TC -> leave Mosaic headroom.
        tm, th, cap, gelu_dt = 512, 2048, 52 << 20, jnp.bfloat16
    elif gen == "v6e":
        # AI break-even ~650 FLOPs/byte; 128 MiB physical VMEM.
        tm, th, cap, gelu_dt = 1024, 2048, 100 << 20, jnp.bfloat16
    elif gen == "v5e":
        # Compute-bound already at tm~256; spend VMEM on th. No bf16 VPU.
        tm, th, cap, gelu_dt = 256, 2048, 100 << 20, jnp.float32
    elif gen == "v5p":
        tm, th, cap, gelu_dt = 512, 2048, 100 << 20, jnp.float32
    else:
        tm, th, cap, gelu_dt = 512, 1024, 64 << 20, jnp.float32
    phys = _vmem_physical_bytes()
    if phys:
        cap = min(cap, int(phys * 0.82))
    return gen, tm, th, cap, gelu_dt


def _pick_th(H, target):
    """Largest hidden tile <= target that divides H (multiple of 128 if possible)."""
    if H <= target or H <= 128:
        return H
    t = (min(target, H) // 128) * 128
    while t >= 128:
        if H % t == 0:
            return t
        t -= 128
    return H


def _vmem_estimate(tm, th, C, H, out_bytes, gelu_bytes, use_scratch):
    return (2 * tm * C * 2             # x tiles (bf16, double-buffered)
            + 2 * C * th * 2           # W1 column blocks
            + 2 * th * C * 2           # W2 row blocks
            + 2 * H * 4                # b1 (resident, f32)
            + 2 * C * 4                # b2
            + 2 * tm * C * out_bytes   # output tiles
            + (tm * C * 4 if use_scratch else 0)   # f32 accumulator scratch
            + tm * th * (4 + 2 * gelu_bytes))      # h (f32) + GELU temporaries


# ---------------------------------------------------------------------------
# Kernels
# ---------------------------------------------------------------------------
def _gelu_tanh(h_f32, dtype):
    # 0.5 * h * (1 + tanh(sqrt(2/pi) * h * (1 + 0.044715*h^2)))   (factored form)
    h = h_f32.astype(dtype)
    c = jnp.asarray(0.7978845608028654, dtype)
    k = jnp.asarray(0.044715, dtype)
    one = jnp.asarray(1.0, dtype)
    half = jnp.asarray(0.5, dtype)
    h2 = h * h
    t = jnp.tanh(c * (h * (one + k * h2)))
    return (half * h) * (one + t)


def _make_single_step_kernel(gelu_dtype):
    """H fits in one hidden tile: no accumulator needed, write o_ref directly."""
    def kernel(x_ref, w1_ref, b1_ref, w2_ref, b2_ref, o_ref):
        h = jnp.dot(x_ref[...], w1_ref[...], preferred_element_type=jnp.float32)
        h = h + b1_ref[...].astype(jnp.float32)
        g = _gelu_tanh(h, gelu_dtype)
        y = jnp.dot(g.astype(w2_ref.dtype), w2_ref[...],
                    preferred_element_type=jnp.float32)
        o_ref[...] = (y + b2_ref[...].astype(jnp.float32)).astype(o_ref.dtype)
    return kernel


def _make_multi_step_kernel(gelu_dtype, acc_in_out):
    """Hidden dim tiled: accumulate partial c_proj sums across the H axis.

    acc_in_out=True  -> output dtype is f32; accumulate directly into the
                        resident output block (no scratch).
    acc_in_out=False -> f32 VMEM scratch accumulator, cast on finalize.
    """
    def kernel(x_ref, w1_ref, b1_ref, w2_ref, b2_ref, o_ref, *scratch):
        acc_ref = o_ref if acc_in_out else scratch[0]
        h_idx = pl.program_id(1)

        @pl.when(h_idx == 0)
        def _():
            acc_ref[...] = jnp.zeros_like(acc_ref)

        # c_fc slice: bf16 operands, f32 accumulation on the MXU.
        h = jnp.dot(x_ref[...], w1_ref[...], preferred_element_type=jnp.float32)
        # b1 is resident as (n_h, th); pick the current hidden block's row.
        h = h + b1_ref[pl.ds(h_idx, 1), :].astype(jnp.float32)

        g = _gelu_tanh(h, gelu_dtype)

        acc_ref[...] += jnp.dot(g.astype(w2_ref.dtype), w2_ref[...],
                                preferred_element_type=jnp.float32)

        @pl.when(h_idx == pl.num_programs(1) - 1)
        def _():
            o_ref[...] = (acc_ref[...] + b2_ref[...].astype(jnp.float32)
                          ).astype(o_ref.dtype)
    return kernel


# ---------------------------------------------------------------------------
# Wrapper
# ---------------------------------------------------------------------------
def mlp_forward(x, w1, b1, w2, b2, *, tm=None, th=None, out_dtype=None):
    """x: [B, T, C];  w1: [C, 4C];  b1: [4C];  w2: [4C, C];  b2: [C]."""
    B, T, C = x.shape
    H = w1.shape[1]
    assert w1.shape == (C, H) and w2.shape == (H, C)
    assert b1.shape == (H,) and b2.shape == (C,)
    M = B * T
    if out_dtype is None:
        out_dtype = x.dtype
    out_bytes = jnp.dtype(out_dtype).itemsize

    gen, tm_auto, th_auto, vmem_cap, gelu_dtype = _tuning()
    gelu_bytes = jnp.dtype(gelu_dtype).itemsize

    # ---- row tile ---------------------------------------------------------
    m_round8 = ((M + 7) // 8) * 8
    if tm is None:
        tm = tm_auto
    tm = max(8, min((tm // 8) * 8, m_round8))
    # v7x: keep the number of row tiles even so both TensorCores get work.
    if gen == "v7x" and tm >= 512:
        n_row = pl.cdiv(m_round8, tm)
        if n_row > 1 and n_row % 2 == 1:
            tm //= 2

    # ---- hidden tile --------------------------------------------------------
    if th is None:
        th = _pick_th(H, th_auto)
    assert H % th == 0, "hidden tile must divide the hidden dimension"

    # ---- shrink tiles until the working set fits the VMEM budget -----------
    def _needs_scratch(nh):
        return nh > 1 and jnp.dtype(out_dtype) != jnp.dtype(jnp.float32)

    n_h = H // th
    use_scratch = _needs_scratch(n_h)
    budget = int(vmem_cap * 0.9)
    while _vmem_estimate(tm, th, C, H, out_bytes, gelu_bytes, use_scratch) > budget:
        if th > 128 and th % 2 == 0 and H % (th // 2) == 0:
            th //= 2
        elif tm > 256:
            tm = max(256, tm // 2)
        elif tm > 8:
            tm = max(8, tm // 2)
        else:
            break
        n_h = H // th
        use_scratch = _needs_scratch(n_h)

    m_pad = pl.cdiv(M, tm) * tm
    n_row = m_pad // tm
    n_h = H // th

    est = _vmem_estimate(tm, th, C, H, out_bytes, gelu_bytes, use_scratch)
    vmem_limit = min(vmem_cap, max(int(est * 1.5) + (4 << 20), 32 << 20))

    # ---- operands: cast matmul inputs to bf16 ONCE here --------------------
    x2 = x.reshape(M, C)
    if m_pad != M:
        x2 = jnp.pad(x2, ((0, m_pad - M), (0, 0)))
    x2 = x2.astype(jnp.bfloat16)
    w1_b = w1.astype(jnp.bfloat16)
    w2_b = w2.astype(jnp.bfloat16)
    b1_2 = b1.reshape(n_h, th).astype(jnp.float32)   # resident, row per h-step
    b2_2 = b2.reshape(1, C).astype(jnp.float32)

    # ---- kernel variant selection ------------------------------------------
    if n_h == 1:
        kernel = _make_single_step_kernel(gelu_dtype)
        scratch_shapes = []
    elif not use_scratch:          # f32 output: accumulate directly into o_ref
        kernel = _make_multi_step_kernel(gelu_dtype, acc_in_out=True)
        scratch_shapes = []
    else:                          # non-f32 output: f32 scratch accumulator
        kernel = _make_multi_step_kernel(gelu_dtype, acc_in_out=False)
        scratch_shapes = [pltpu.VMEM((tm, C), jnp.float32)]

    out = pl.pallas_call(
        kernel,
        out_shape=jax.ShapeDtypeStruct((m_pad, C), out_dtype),
        grid_spec=pltpu.PrefetchScalarGridSpec(
            num_scalar_prefetch=0,
            grid=(n_row, n_h),                               # reduction (H) last
            in_specs=[
                pl.BlockSpec((tm, C), lambda i, h: (i, 0)),  # x row tile
                pl.BlockSpec((C, th), lambda i, h: (0, h)),  # W1 column block
                pl.BlockSpec((n_h, th), lambda i, h: (0, 0)),  # b1 (resident)
                pl.BlockSpec((th, C), lambda i, h: (h, 0)),  # W2 row block
                pl.BlockSpec((1, C), lambda i, h: (0, 0)),   # b2 (resident)
            ],
            out_specs=pl.BlockSpec((tm, C), lambda i, h: (i, 0)),
            scratch_shapes=scratch_shapes,
        ),
        compiler_params=pltpu.CompilerParams(
            dimension_semantics=("parallel", "arbitrary"),
            vmem_limit_bytes=vmem_limit),
    )(x2, w1_b, b1_2, w2_b, b2_2)

    if m_pad != M:
        out = out[:M]
    return out.reshape(B, T, C)


# ---------------------------------------------------------------------------
# Reference & self-test
# ---------------------------------------------------------------------------
def _reference(x, w1, b1, w2, b2):
    h = jnp.einsum("btc,ch->bth", x, w1) + b1
    c = 0.7978845608028654
    g = 0.5 * h * (1.0 + jnp.tanh(c * (h + 0.044715 * h ** 3)))
    return jnp.einsum("bth,hc->btc", g, w2) + b2


def _make_params(key, C, H):
    k1, kb1, k2, kb2 = jax.random.split(key, 4)
    bound1 = 1.0 / math.sqrt(C)          # PyTorch nn.Linear default init
    w1 = jax.random.uniform(k1, (C, H), jnp.float32, -bound1, bound1)
    b1 = jax.random.uniform(kb1, (H,), jnp.float32, -bound1, bound1)
    bound2 = 1.0 / math.sqrt(H)
    w2 = jax.random.uniform(k2, (H, C), jnp.float32, -bound2, bound2)
    b2 = jax.random.uniform(kb2, (C,), jnp.float32, -bound2, bound2)
    return w1, b1, w2, b2


if __name__ == "__main__":
    key = jax.random.PRNGKey(0)
    k_a, k_b, k_p1, k_p2 = jax.random.split(key, 4)

    # --- Test 1: module-spec shapes (batch=2, seq=8, n_embd=32) ------------
    B, T, C = 2, 8, 32
    H = 4 * C
    x = jax.random.normal(k_a, (B, T, C), dtype=jnp.float32)
    w1, b1, w2, b2 = _make_params(k_p1, C, H)
    y = jax.block_until_ready(mlp_forward(x, w1, b1, w2, b2))
    y_ref = _reference(x, w1, b1, w2, b2)
    assert y.shape == (B, T, C) and y.dtype == x.dtype
    assert jnp.allclose(y, y_ref, atol=5e-2, rtol=5e-2), "test1 mismatch"

    # --- Test 2: tiled hidden axis + ragged-M padding + acc-in-output ------
    B2, T2, C2 = 2, 100, 128           # M = 200 (not a multiple of tm=64)
    H2 = 4 * C2                        # 512 -> 4 hidden steps with th=128
    x2 = jax.random.normal(k_b, (B2, T2, C2), dtype=jnp.float32)
    w1b, b1b, w2b, b2b = _make_params(k_p2, C2, H2)
    y2 = jax.block_until_ready(
        mlp_forward(x2, w1b, b1b, w2b, b2b, tm=64, th=128))
    y2_ref = _reference(x2, w1b, b1b, w2b, b2b)
    assert y2.shape == (B2, T2, C2)
    assert jnp.allclose(y2, y2_ref, atol=5e-2, rtol=5e-2), "test2 mismatch"

    # --- Test 3: bf16 output -> f32 scratch accumulator path ---------------
    y3 = jax.block_until_ready(
        mlp_forward(x2, w1b, b1b, w2b, b2b, tm=64, th=128,
                    out_dtype=jnp.bfloat16))
    assert y3.dtype == jnp.bfloat16
    assert jnp.allclose(y3.astype(jnp.float32), y2_ref, atol=1e-1, rtol=1e-1), \
        "test3 mismatch"

    print("KERNEL_OK")
</pallas_src>

<mosaic_0001>
module attributes {stable_mosaic.version = 11 : i64} {
  func.func @kernel(%arg0: i32, %arg1: i32, %arg2: memref<16x32xbf16, #tpu.memory_space<vmem>>, %arg3: memref<32x128xbf16, #tpu.memory_space<vmem>>, %arg4: memref<1x128xf32, #tpu.memory_space<vmem>>, %arg5: memref<128x32xbf16, #tpu.memory_space<vmem>>, %arg6: memref<1x32xf32, #tpu.memory_space<vmem>>, %arg7: memref<16x32xf32, #tpu.memory_space<vmem>>) attributes {dimension_semantics = [#tpu.dimension_semantics<parallel>, #tpu.dimension_semantics<arbitrary>], iteration_bounds = array<i64: 1, 1>, scalar_prefetch = 0 : i64, scratch_operands = 0 : i64, tpu.core_type = #tpu.core_type<tc>, window_params = [{transform_indices = @transform_0, window_bounds = array<i64: 16, 32>}, {transform_indices = @transform_1, window_bounds = array<i64: 32, 128>}, {pipeline_mode = #tpu.pipeline_mode<synchronous>, transform_indices = @transform_2, window_bounds = array<i64: 1, 128>}, {transform_indices = @transform_3, window_bounds = array<i64: 128, 32>}, {pipeline_mode = #tpu.pipeline_mode<synchronous>, transform_indices = @transform_4, window_bounds = array<i64: 1, 32>}, {transform_indices = @transform_5, window_bounds = array<i64: 16, 32>}]} {
    %c0 = arith.constant 0 : index
    %c0_0 = arith.constant 0 : index
    %0 = vector.load %arg2[%c0, %c0_0] : memref<16x32xbf16, #tpu.memory_space<vmem>>, vector<16x32xbf16>
    %c0_1 = arith.constant 0 : index
    %c0_2 = arith.constant 0 : index
    %1 = vector.load %arg3[%c0_1, %c0_2] : memref<32x128xbf16, #tpu.memory_space<vmem>>, vector<32x128xbf16>
    %cst = arith.constant dense<0.000000e+00> : vector<16x128xf32>
    %2 = tpu.matmul %0, %1, %cst {dimension_numbers = #tpu.dot_dimension_numbers<[1], [0], [0], [1], [0, 0, 1, 1], [], []>} : vector<16x32xbf16>, vector<32x128xbf16>, vector<16x128xf32> -> vector<16x128xf32>
    %c0_3 = arith.constant 0 : index
    %c0_4 = arith.constant 0 : index
    %3 = vector.load %arg4[%c0_3, %c0_4] : memref<1x128xf32, #tpu.memory_space<vmem>>, vector<1x128xf32>
    %4 = vector.broadcast %3 : vector<1x128xf32> to vector<16x128xf32>
    %5 = arith.addf %2, %4 : vector<16x128xf32>
    %6 = arith.mulf %5, %5 : vector<16x128xf32>
    %cst_5 = arith.constant 4.471500e-02 : f32
    %7 = vector.broadcast %cst_5 : f32 to vector<16x128xf32>
    %8 = arith.mulf %7, %6 : vector<16x128xf32>
    %cst_6 = arith.constant 1.000000e+00 : f32
    %9 = vector.broadcast %cst_6 : f32 to vector<16x128xf32>
    %10 = arith.addf %9, %8 : vector<16x128xf32>
    %11 = arith.mulf %5, %10 : vector<16x128xf32>
    %cst_7 = arith.constant 0.797884583 : f32
    %12 = vector.broadcast %cst_7 : f32 to vector<16x128xf32>
    %13 = arith.mulf %12, %11 : vector<16x128xf32>
    %14 = math.tanh %13 : vector<16x128xf32>
    %cst_8 = arith.constant 5.000000e-01 : f32
    %15 = vector.broadcast %cst_8 : f32 to vector<16x128xf32>
    %16 = arith.mulf %15, %5 : vector<16x128xf32>
    %cst_9 = arith.constant 1.000000e+00 : f32
    %17 = vector.broadcast %cst_9 : f32 to vector<16x128xf32>
    %18 = arith.addf %17, %14 : vector<16x128xf32>
    %19 = arith.mulf %16, %18 : vector<16x128xf32>
    %20 = arith.truncf %19 : vector<16x128xf32> to vector<16x128xbf16>
    %c0_10 = arith.constant 0 : index
    %c0_11 = arith.constant 0 : index
    %21 = vector.load %arg5[%c0_10, %c0_11] : memref<128x32xbf16, #tpu.memory_space<vmem>>, vector<128x32xbf16>
    %cst_12 = arith.constant dense<0.000000e+00> : vector<16x32xf32>
    %22 = tpu.matmul %20, %21, %cst_12 {dimension_numbers = #tpu.dot_dimension_numbers<[1], [0], [0], [1], [0, 0, 1, 1], [], []>} : vector<16x128xbf16>, vector<128x32xbf16>, vector<16x32xf32> -> vector<16x32xf32>
    %c0_13 = arith.constant 0 : index
    %c0_14 = arith.constant 0 : index
    %23 = vector.load %arg6[%c0_13, %c0_14] : memref<1x32xf32, #tpu.memory_space<vmem>>, vector<1x32xf32>
    %24 = vector.broadcast %23 : vector<1x32xf32> to vector<16x32xf32>
    %25 = arith.addf %22, %24 : vector<16x32xf32>
    %c0_15 = arith.constant 0 : index
    %c0_16 = arith.constant 0 : index
    %26 = vector.load %arg7[%c0_15, %c0_16] : memref<16x32xf32, #tpu.memory_space<vmem>>, vector<16x32xf32>
    tpu.vector_store %arg7[%c0_15, %c0_16], %25 {strides = array<i32>} : memref<16x32xf32, #tpu.memory_space<vmem>>, vector<16x32xf32>,
    return
  }
  func.func @transform_0(%arg0: i32, %arg1: i32) -> (i32, i32) {
    %c0_i32 = arith.constant 0 : i32
    %c0_i32_0 = arith.constant 0 : i32
    return %arg0, %c0_i32 : i32, i32
  }
  func.func @transform_1(%arg0: i32, %arg1: i32) -> (i32, i32) {
    %c0_i32 = arith.constant 0 : i32
    %c0_i32_0 = arith.constant 0 : i32
    return %c0_i32, %arg1 : i32, i32
  }
  func.func @transform_2(%arg0: i32, %arg1: i32) -> (i32, i32) {
    %c0_i32 = arith.constant 0 : i32
    %c0_i32_0 = arith.constant 0 : i32
    %c0_i32_1 = arith.constant 0 : i32
    return %c0_i32, %c0_i32_0 : i32, i32
  }
  func.func @transform_3(%arg0: i32, %arg1: i32) -> (i32, i32) {
    %c0_i32 = arith.constant 0 : i32
    %c0_i32_0 = arith.constant 0 : i32
    return %arg1, %c0_i32 : i32, i32
  }
  func.func @transform_4(%arg0: i32, %arg1: i32) -> (i32, i32) {
    %c0_i32 = arith.constant 0 : i32
    %c0_i32_0 = arith.constant 0 : i32
    %c0_i32_1 = arith.constant 0 : i32
    return %c0_i32, %c0_i32_0 : i32, i32
  }
  func.func @transform_5(%arg0: i32, %arg1: i32) -> (i32, i32) {
    %c0_i32 = arith.constant 0 : i32
    %c0_i32_0 = arith.constant 0 : i32
    return %arg0, %c0_i32 : i32, i32
  }
}

</mosaic_0001>

<llo_original>
// kernel: tpu_custom_call.1
$region0: #{tpu_custom_call.1}
  #allocation0 [shape = 'u32[]', space=smem, size = 0x4, offset = 0x4, fixed_abs, tag = 'smem constant byte address 0x4 - core index']
  #allocation1 [shape = 'u32[144,128]{1,0:T(1,128)}', space=vmem, size = 0x12000, scoped, tag = 'internal scratch']
  %s0 = inlined_call_operand.vmem [shape: bf16[16,32], index: 0, kind: input, shape index: {}]
  %s1 = inlined_call_operand.vmem [shape: bf16[32,128], index: 1, kind: input, shape index: {}]
  %s2 = inlined_call_operand.vmem [shape: f32[1,128], index: 2, kind: input, shape index: {}]
  %s3 = inlined_call_operand.vmem [shape: bf16[128,32], index: 3, kind: input, shape index: {}]
  %s4 = inlined_call_operand.vmem [shape: f32[1,32], index: 4, kind: input, shape index: {}]
  %s5 = inlined_call_operand.hbm [shape: f32[16,32], index: 5, kind: output, shape index: {}]
  %s6 = sld [smem:[#allocation0]]
  $region30: #{tpu_custom_call.1} parent=0
    _
  %s8 = ssub.s32 1, %s6
  %s9 = scalar_select 0, %s8, %s6
  $region1: #{tpu_custom_call.1} parent=0
    #allocation2 [shape = 'u8[8192]{0}', space=vmem, size = 0x2000, scoped, tag = 'output window, operand 0, single buffered']
    #allocation3 [shape = 's32[1]{0}', space=sflag, size = 0x4, scoped, tag = 'scoped memory for tpu_custom_call.1']
    %10 = vsyncpa [#allocation3], 0
    // Predicated region
    $region2: #{tpu_custom_call.1} parent=1 // pred_check
      _
    $region3: #{tpu_custom_call.1} parent=1 // pred_check_branch
      %12 = sbr.rel (0) target = $region5
    $region4: #{tpu_custom_call.1} parent=1 // pred_region
      _
    $region5: #{tpu_custom_call.1} parent=1 // pred_fallthru
      _
    // Predicated region
    $region6: #{tpu_custom_call.1} parent=1 // pred_check
      _
    $region7: #{tpu_custom_call.1} parent=1 // pred_check_branch
      %14 = sbr.rel (0) target = $region9
    $region8: #{tpu_custom_call.1} parent=1 // pred_region
      _
    $region9: #{tpu_custom_call.1} parent=1 // pred_fallthru
      _
    // Predicated region
    $region10: #{tpu_custom_call.1} parent=1 // pred_check
      _
    $region11: #{tpu_custom_call.1} parent=1 // pred_check_branch
      %16 = sbr.rel (0) target = $region13
    $region12: #{tpu_custom_call.1} parent=1 // pred_region
      _
    $region13: #{tpu_custom_call.1} parent=1 // pred_fallthru
      _
    // Predicated region
    $region14: #{tpu_custom_call.1} parent=1 // pred_check
      _
    $region15: #{tpu_custom_call.1} parent=1 // pred_check_branch
      %18 = sbr.rel (0) target = $region17
    $region16: #{tpu_custom_call.1} parent=1 // pred_region
      _
    $region17: #{tpu_custom_call.1} parent=1 // pred_fallthru
      _
    // Predicated region
    $region18: #{tpu_custom_call.1} parent=1 // pred_check
      _
    $region19: #{tpu_custom_call.1} parent=1 // pred_check_branch
      %20 = sbr.rel (0) target = $region21
    $region20: #{tpu_custom_call.1} parent=1 // pred_region
      _
    $region21: #{tpu_custom_call.1} parent=1 // pred_fallthru
      _
    %v22 = vld [vmem:[%s0] sm:$0xf]
    %v23 = vld [vmem:[%s0 + $0x4] sm:$0xf]
    %v24 = vld [vmem:[%s1] sm:$0xf]
    %v25 = vld [vmem:[%s1 + $0x4] sm:$0xf]
    %v26 = vld [vmem:[%s1 + $0x8] sm:$0xf]
    %v27 = vld [vmem:[%s1 + $0xc] sm:$0xf]
    %v28 = vld [vmem:[%s2] sm:$0x1]
    %v30 = vlaneseq
    %v31 = vshrl.u32 %v30, 7
    %v32 = vsub.s32 0, %v31
    %v33 = vrot.slane %v28, %v32
    %v37 = vunpack.c.l.b16 %v22
    %v38 = vunpack.c.l.b16 %v23
    %v39 = vpack.c.b16 %v38, %v37
    %v44 = vunpack.c.l.b16 %v24
    %v45 = vunpack.c.l.b16 %v25
    %v46 = vunpack.c.l.b16 %v26
    %v47 = vunpack.c.l.b16 %v27
    %v48 = vpack.c.b16 %v45, %v44
    %v49 = vpack.c.b16 %v47, %v46
    %vm52 = vcmask 261120
    %v54 = vsel %vm52, %v39, 0
    %56 = vmatprep.subr.bf16.mxu0 0
    %57 = vmatpush1.bf16.msra.mxu0 0
    %58 = vmatprep.subr.bf16.mxu0 0
    %59 = vmatpush1.bf16.msra.mxu0 0
    %60 = vmatprep.subr.bf16.mxu0 0
    %61 = vmatpush1.bf16.msra.mxu0 0
    %62 = vmatprep.subr.bf16.mxu0 0
    %63 = vmatpush1.bf16.msra.mxu0 0
    %64 = vmatprep.subr.bf16.mxu0 0
    %65 = vmatpush1.bf16.msra.mxu0 0
    %66 = vmatprep.subr.bf16.mxu0 0
    %67 = vmatpush1.bf16.msra.mxu0 0
    %68 = vmatprep.subr.bf16.mxu0 0
    %69 = vmatpush1.bf16.msra.mxu0 %v49
    %70 = vmatprep.subr.bf16.mxu0 0
    %71 = vmatpush1.bf16.msra.mxu0 %v48
    %72 = vmatprep.subr.bf16.mxu0 0
    %73 = vmatpush2.bf16.msra.mxu0 0
    %74 = vmatprep.subr.bf16.mxu0 0
    %75 = vmatpush2.bf16.msra.mxu0 0
    %76 = vmatprep.subr.bf16.mxu0 0
    %77 = vmatpush2.bf16.msra.mxu0 0
    %78 = vmatprep.subr.bf16.mxu0 0
    %79 = vmatpush2.bf16.msra.mxu0 0
    %80 = vmatprep.subr.bf16.mxu0 0
    %81 = vmatpush2.bf16.msra.mxu0 0
    %82 = vmatprep.subr.bf16.mxu0 0
    %83 = vmatpush2.bf16.msra.mxu0 0
    %84 = vmatprep.subr.bf16.mxu0 0
    %85 = vmatpush2.bf16.msra.mxu0 0
    %86 = vmatprep.subr.bf16.mxu0 0
    %87 = vmatpush2.bf16.msra.mxu0 0
    %88 = vmatprep.mubr.bf16.mxu0 0
    %89 = vmatmul.mubr.bf16.gmra.mxu0 %v54
    %v90 = vpop.f32.mrf.mxu0
    %v91 = vadd.f32 %v33, %v90
    %v92 = vpop.f32.mrf.mxu0
    %v93 = vpop.f32.mrf.mxu0
    %v94 = vadd.f32 %v33, %v93
    %v95 = vpop.f32.mrf.mxu0
    %96 = vdwg.mxu0
    %v97 = vmul.f32 %v91, %v91
    %v98 = vmul.f32 %v94, %v94
    %v99 = vmul.f32 %v97, 0.044715
    %v100 = vmul.f32 %v98, 0.044715
    %v101 = vadd.f32 %v99, 1.0
    %v102 = vadd.f32 %v100, 1.0
    %v103 = vmul.f32 %v91, %v101
    %v104 = vmul.f32 %v94, %v102
    %v105 = vmul.f32 %v103, 0.7978846
    %v106 = vmul.f32 %v104, 0.7978846
    %v107 = vtanh.pop %v105
    %v108 = vtanh.pop %v106
    %v109 = vmul.f32 %v91, 0.5
    %v110 = vmul.f32 %v94, 0.5
    %v111 = vadd.f32 %v107, 1.0
    %v112 = vadd.f32 %v108, 1.0
    %v113 = vmul.f32 %v109, %v111
    %v114 = vmul.f32 %v110, %v112
    %v115 = vpack.c.bf16 %v114, %v113
    %v116 = vld [vmem:[%s3] sm:$0xf]
    %v117 = vld [vmem:[%s3 + $0x4] sm:$0xf]
    %v118 = vld [vmem:[%s3 + $0x8] sm:$0xf]
    %v119 = vld [vmem:[%s3 + $0xc] sm:$0xf]
    %v120 = vld [vmem:[%s3 + $0x10] sm:$0xf]
    %v121 = vld [vmem:[%s3 + $0x14] sm:$0xf]
    %v122 = vld [vmem:[%s3 + $0x18] sm:$0xf]
    %v123 = vld [vmem:[%s3 + $0x1c] sm:$0xf]
    %v124 = vld [vmem:[%s3 + $0x20] sm:$0xf]
    %v125 = vld [vmem:[%s3 + $0x24] sm:$0xf]
    %v126 = vld [vmem:[%s3 + $0x28] sm:$0xf]
    %v127 = vld [vmem:[%s3 + $0x2c] sm:$0xf]
    %v128 = vld [vmem:[%s3 + $0x30] sm:$0xf]
    %v129 = vld [vmem:[%s3 + $0x34] sm:$0xf]
    %v130 = vld [vmem:[%s3 + $0x38] sm:$0xf]
    %v131 = vld [vmem:[%s3 + $0x3c] sm:$0xf]
    %v132 = vld [vmem:[%s4] sm:$0x1]
    %v134 = vlaneseq
    %v135 = vshrl.u32 %v134, 7
    %v136 = vsub.s32 0, %v135
    %v137 = vrot.slane %v132, %v136
    %v155 = vunpack.c.l.b16 %v116
    %v156 = vunpack.c.l.b16 %v117
    %v157 = vunpack.c.l.b16 %v118
    %v158 = vunpack.c.l.b16 %v119
    %v159 = vunpack.c.l.b16 %v120
    %v160 = vunpack.c.l.b16 %v121
    %v161 = vunpack.c.l.b16 %v122
    %v162 = vunpack.c.l.b16 %v123
    %v163 = vunpack.c.l.b16 %v124
    %v164 = vunpack.c.l.b16 %v125
    %v165 = vunpack.c.l.b16 %v126
    %v166 = vunpack.c.l.b16 %v127
    %v167 = vunpack.c.l.b16 %v128
    %v168 = vunpack.c.l.b16 %v129
    %v169 = vunpack.c.l.b16 %v130
    %v170 = vunpack.c.l.b16 %v131
    %v171 = vpack.c.b16 %v156, %v155
    %v172 = vpack.c.b16 %v158, %v157
    %v173 = vpack.c.b16 %v160, %v159
    %v174 = vpack.c.b16 %v162, %v161
    %v175 = vpack.c.b16 %v164, %v163
    %v176 = vpack.c.b16 %v166, %v165
    %v177 = vpack.c.b16 %v168, %v167
    %v178 = vpack.c.b16 %v170, %v169
    %187 = vmatprep.subr.bf16.mxu0 0
    %188 = vmatpush1.bf16.msra.mxu0 %v178
    %189 = vmatprep.subr.bf16.mxu0 0
    %190 = vmatpush1.bf16.msra.mxu0 %v177
    %191 = vmatprep.subr.bf16.mxu0 0
    %192 = vmatpush1.bf16.msra.mxu0 %v176
    %193 = vmatprep.subr.bf16.mxu0 0
    %194 = vmatpush1.bf16.msra.mxu0 %v175
    %195 = vmatprep.subr.bf16.mxu0 0
    %196 = vmatpush1.bf16.msra.mxu0 %v174
    %197 = vmatprep.subr.bf16.mxu0 0
    %198 = vmatpush1.bf16.msra.mxu0 %v173
    %199 = vmatprep.subr.bf16.mxu0 0
    %200 = vmatpush1.bf16.msra.mxu0 %v172
    %201 = vmatprep.subr.bf16.mxu0 0
    %202 = vmatpush1.bf16.msra.mxu0 %v171
    %203 = vmatprep.subr.bf16.mxu0 0
    %204 = vmatpush2.bf16.msra.mxu0 0
    %205 = vmatprep.subr.bf16.mxu0 0
    %206 = vmatpush2.bf16.msra.mxu0 0
    %207 = vmatprep.subr.bf16.mxu0 0
    %208 = vmatpush2.bf16.msra.mxu0 0
    %209 = vmatprep.subr.bf16.mxu0 0
    %210 = vmatpush2.bf16.msra.mxu0 0
    %211 = vmatprep.subr.bf16.mxu0 0
    %212 = vmatpush2.bf16.msra.mxu0 0
    %213 = vmatprep.subr.bf16.mxu0 0
    %214 = vmatpush2.bf16.msra.mxu0 0
    %215 = vmatprep.subr.bf16.mxu0 0
    %216 = vmatpush2.bf16.msra.mxu0 0
    %217 = vmatprep.subr.bf16.mxu0 0
    %218 = vmatpush2.bf16.msra.mxu0 0
    %219 = vmatprep.mubr.bf16.mxu0 0
    %220 = vmatmul.mubr.bf16.gmra.mxu0 %v115
    %v221 = vpop.f32.mrf.mxu0
    %v222 = vadd.f32 %v137, %v221
    %v223 = vpop.f32.mrf.mxu0
    %v224 = vpop.f32.mrf.mxu0
    %v225 = vadd.f32 %v137, %v224
    %v226 = vpop.f32.mrf.mxu0
    %227 = vdwg.mxu0
    %228 = vst.msk [vmem:[#allocation2] sm:$0xff] %vm52, %v222
    %229 = vst.msk [vmem:[#allocation2 + $0x8] sm:$0xff] %vm52, %v225
    // Predicated region
    $region22: #{tpu_custom_call.1} parent=1 // pred_check
      _
    $region23: #{tpu_custom_call.1} parent=1 // pred_check_branch
      %231 = sbr.rel (0) target = $region25
    $region24: #{tpu_custom_call.1} parent=1 // pred_region
      %s233 = ssub.s32 256, 256
      %234 = vsyncadd [#allocation3], %s233
      %s235 = sshll.u32 [#allocation2], 4
      %s236 = int_to_ptr.vmem [resolvable:$true] %s235
      %241 = dma.vmem_to_hbm [thread:$0]  %s236, 256, %s5, [#allocation3], 128, 128, 8
    $region25: #{tpu_custom_call.1} parent=1 // pred_fallthru
      _
    // Predicated region
    $region26: #{tpu_custom_call.1} parent=1 // pred_check
      _
    $region27: #{tpu_custom_call.1} parent=1 // pred_check_branch
      %243 = sbr.rel (0) target = $region29
    $region28: #{tpu_custom_call.1} parent=1 // pred_region
      %244 = dma.done [#allocation3], 256
    $region29: #{tpu_custom_call.1} parent=1 // pred_fallthru
      _
    %245 = vsyncpa [#allocation3], 1

</llo_original>
